<compile_context>
chip_gen: v5e
topology: v5e:2x2
jax: 0.10.0
libtpu: 0.0.40
codegen_flags: <defaults>
</compile_context>

<pallas_src>
import jax
import jax.numpy as jnp
from jax import lax
from jax.experimental import pallas as pl
from jax.experimental.pallas import tpu as pltpu


def mlp_kernel(x_ref, w1_ref, b1w2_ref, b2_ref, out_ref):
    # fc1 on the MXU, contracting the input axis of both operands (NT matmul):
    # (hidden, in) x (tile_n, in)^T -> (hidden, tile_n), batch on lanes.
    h = lax.dot_general(
        w1_ref[...], x_ref[...],
        dimension_numbers=(((1,), (1,)), ((), ())),
        preferred_element_type=jnp.float32,
    )
    b1 = b1w2_ref[:, 0:1]                       # (hidden, 1), broadcasts over lanes
    w2 = b1w2_ref[:, 1:2]                       # (hidden, 1)
    h = jnp.maximum(h + b1, 0.0)                # bias + ReLU on the VPU
    # fc2 on VPU/XLU: broadcast-multiply by the weight column, reduce over the
    # hidden (sublane) axis -> (1, tile_n) lane-dense output; b2 is an SMEM scalar.
    out = jnp.sum(h * w2, axis=0, keepdims=True) + b2_ref[0, 0]
    out_ref[...] = out.astype(out_ref.dtype)


def mlp_forward(x, w1, b1, w2, b2, *, tile_n=16384, fc1_in_bf16=False):
    """x: (N, input). w1: (hidden, input), b1: (hidden, 1),
    w2: (hidden, 1), b2: (1, 1).  Returns (N, 1)."""
    n, input_size = x.shape
    hidden_size = w1.shape[0]
    assert w1.shape == (hidden_size, input_size)
    assert b1.shape == (hidden_size, 1)
    assert w2.shape == (hidden_size, 1), "kernel is specialized for output_size == 1"
    assert b2.shape == (1, 1)
    out_dtype = x.dtype

    # Batch (lane) tile: multiple of 128, never over-padding tiny batches, and
    # capped so the grid keeps >= 2 tiles when N allows (v7x megacore sharding).
    tile_n = max(128, min(tile_n, pl.cdiv(pl.cdiv(n, 2), 128) * 128))
    grid = (pl.cdiv(n, tile_n),)

    if fc1_in_bf16:
        # Halves HBM traffic of the dominant x stream on v6e/v7x; fc2, biases and
        # the output stay f32 (v5e's VPU/EUP have no bf16).
        x = x.astype(jnp.bfloat16)
        w1 = w1.astype(jnp.bfloat16)

    b1w2 = jnp.concatenate([b1, w2], axis=1).astype(jnp.float32)     # (hidden, 2)
    b2 = b2.astype(jnp.float32)

    # Right-sized VMEM budget: x double-buffer (last dim lane-pads 10 -> 128),
    # output double-buffer, plus headroom for the (hidden, tile_n) f32 intermediates.
    x_elt = 2 if fc1_in_bf16 else 4
    vmem_bytes = 2 * tile_n * 128 * x_elt + 2 * tile_n * 8 * 4 + 8 * 1024 * 1024

    outT = pl.pallas_call(
        mlp_kernel,
        out_shape=jax.ShapeDtypeStruct((1, n), out_dtype),
        grid=grid,
        in_specs=[
            pl.BlockSpec((tile_n, input_size), lambda i: (i, 0)),       # x tile
            pl.BlockSpec((hidden_size, input_size), lambda i: (0, 0)),  # w1 (VMEM-resident)
            pl.BlockSpec((hidden_size, 2), lambda i: (0, 0)),           # [b1 | w2] (VMEM-resident)
            pl.BlockSpec(memory_space=pltpu.MemorySpace.SMEM),          # b2 scalar in SMEM
        ],
        out_specs=pl.BlockSpec((1, tile_n), lambda i: (0, i)),
        compiler_params=pltpu.CompilerParams(
            dimension_semantics=("parallel",),     # v7x: 2 TCs split the batch tiles
            vmem_limit_bytes=int(vmem_bytes),
        ),
    )(x, w1, b1w2, b2)

    # The module returns (N, 1); keep the relayout here.  (Drop it if the consumer
    # can accept the lane-dense (1, N) form directly.)
    return outT.reshape(n, 1)


def init_params(key, input_size, hidden_size, output_size):
    # Mimics nn.Linear's U(-1/sqrt(fan_in), 1/sqrt(fan_in)), stored in the layouts
    # the kernel wants: w1 (hidden, in) [PyTorch layout], b1 (hidden, 1),
    # w2 (hidden, out) [(in, out) layout], b2 (1, out).
    k1, k2, k3, k4 = jax.random.split(key, 4)
    bound1 = 1.0 / jnp.sqrt(input_size)
    bound2 = 1.0 / jnp.sqrt(hidden_size)
    w1 = jax.random.uniform(k1, (hidden_size, input_size), jnp.float32, -bound1, bound1)
    b1 = jax.random.uniform(k2, (hidden_size, 1), jnp.float32, -bound1, bound1)
    w2 = jax.random.uniform(k3, (hidden_size, output_size), jnp.float32, -bound2, bound2)
    b2 = jax.random.uniform(k4, (1, output_size), jnp.float32, -bound2, bound2)
    return w1, b1, w2, b2


if __name__ == "__main__":
    input_size, hidden_size, output_size = 10, 20, 1
    num_samples = 100

    key = jax.random.PRNGKey(0)
    kx, kp = jax.random.split(key)
    x = jax.random.normal(kx, (num_samples, input_size), jnp.float32)
    w1, b1, w2, b2 = init_params(kp, input_size, hidden_size, output_size)

    out = mlp_forward(x, w1, b1, w2, b2)
    out = jax.block_until_ready(out)

    # Plain-JAX reference (identical math to nn.Linear -> ReLU -> nn.Linear),
    # forced to true-f32 matmuls so it matches the kernel's f32 accumulation.
    h_ref = jnp.maximum(
        jnp.dot(x, w1.T, precision=lax.Precision.HIGHEST) + b1.T, 0.0)
    ref = jnp.dot(h_ref, w2, precision=lax.Precision.HIGHEST) + b2

    assert out.shape == (num_samples, output_size)
    assert jnp.allclose(out, ref, atol=1e-4, rtol=1e-4), \
        float(jnp.max(jnp.abs(out - ref)))

    print("KERNEL_OK")
</pallas_src>

<mosaic_0001>
module attributes {stable_mosaic.version = 11 : i64} {
  func.func @mlp_kernel(%arg0: i32, %arg1: memref<128x10xf32, #tpu.memory_space<vmem>>, %arg2: memref<20x10xf32, #tpu.memory_space<vmem>>, %arg3: memref<20x2xf32, #tpu.memory_space<vmem>>, %arg4: memref<1x1xf32, #tpu.memory_space<smem>>, %arg5: memref<1x128xf32, #tpu.memory_space<vmem>>) attributes {dimension_semantics = [#tpu.dimension_semantics<parallel>], iteration_bounds = array<i64: 1>, scalar_prefetch = 0 : i64, scratch_operands = 0 : i64, tpu.core_type = #tpu.core_type<tc>, window_params = [{transform_indices = @transform_0, window_bounds = array<i64: 128, 10>}, {pipeline_mode = #tpu.pipeline_mode<synchronous>, transform_indices = @transform_1, window_bounds = array<i64: 20, 10>}, {pipeline_mode = #tpu.pipeline_mode<synchronous>, transform_indices = @transform_2, window_bounds = array<i64: 20, 2>}, {transform_indices = @transform_3, window_bounds = array<i64: 1, 1>}, {transform_indices = @transform_4, window_bounds = array<i64: 1, 128>}]} {
    %c0 = arith.constant 0 : index
    %c0_0 = arith.constant 0 : index
    %0 = vector.load %arg2[%c0, %c0_0] : memref<20x10xf32, #tpu.memory_space<vmem>>, vector<20x10xf32>
    %c0_1 = arith.constant 0 : index
    %c0_2 = arith.constant 0 : index
    %1 = vector.load %arg1[%c0_1, %c0_2] : memref<128x10xf32, #tpu.memory_space<vmem>>, vector<128x10xf32>
    %cst = arith.constant dense<0.000000e+00> : vector<20x128xf32>
    %2 = tpu.matmul %0, %1, %cst {dimension_numbers = #tpu.dot_dimension_numbers<[1], [1], [0], [0], [0, 0, 1, 0], [], []>} : vector<20x10xf32>, vector<128x10xf32>, vector<20x128xf32> -> vector<20x128xf32>
    %c0_3 = arith.constant 0 : index
    %c0_4 = arith.constant 0 : index
    %3 = vector.load %arg3[%c0_3, %c0_4] : memref<20x2xf32, #tpu.memory_space<vmem>>, vector<20x1xf32>
    %c0_5 = arith.constant 0 : index
    %c1 = arith.constant 1 : index
    %4 = vector.load %arg3[%c0_5, %c1] : memref<20x2xf32, #tpu.memory_space<vmem>>, vector<20x1xf32>
    %5 = vector.broadcast %3 : vector<20x1xf32> to vector<20x128xf32>
    %6 = arith.addf %2, %5 : vector<20x128xf32>
    %cst_6 = arith.constant 0.000000e+00 : f32
    %7 = vector.broadcast %cst_6 : f32 to vector<20x128xf32>
    %8 = arith.maximumf %6, %7 : vector<20x128xf32>
    %9 = vector.broadcast %4 : vector<20x1xf32> to vector<20x128xf32>
    %10 = arith.mulf %8, %9 : vector<20x128xf32>
    %cst_7 = arith.constant dense<0.000000e+00> : vector<128xf32>
    %11 = vector.multi_reduction <add>, %10, %cst_7 [0] : vector<20x128xf32> to vector<128xf32>
    %12 = vector.shape_cast %11 : vector<128xf32> to vector<1x128xf32>
    %c0_8 = arith.constant 0 : index
    %c0_9 = arith.constant 0 : index
    %13 = memref.load %arg4[%c0_8, %c0_9] : memref<1x1xf32, #tpu.memory_space<smem>>
    %14 = vector.broadcast %13 : f32 to vector<1x128xf32>
    %15 = arith.addf %12, %14 : vector<1x128xf32>
    %c0_10 = arith.constant 0 : index
    %c0_11 = arith.constant 0 : index
    %16 = vector.load %arg5[%c0_10, %c0_11] : memref<1x128xf32, #tpu.memory_space<vmem>>, vector<1x128xf32>
    tpu.vector_store %arg5[%c0_10, %c0_11], %15 {strides = array<i32>} : memref<1x128xf32, #tpu.memory_space<vmem>>, vector<1x128xf32>,
    return
  }
  func.func @transform_0(%arg0: i32) -> (i32, i32) {
    %c0_i32 = arith.constant 0 : i32
    %c0_i32_0 = arith.constant 0 : i32
    return %arg0, %c0_i32 : i32, i32
  }
  func.func @transform_1(%arg0: i32) -> (i32, i32) {
    %c0_i32 = arith.constant 0 : i32
    %c0_i32_0 = arith.constant 0 : i32
    %c0_i32_1 = arith.constant 0 : i32
    return %c0_i32, %c0_i32_0 : i32, i32
  }
  func.func @transform_2(%arg0: i32) -> (i32, i32) {
    %c0_i32 = arith.constant 0 : i32
    %c0_i32_0 = arith.constant 0 : i32
    %c0_i32_1 = arith.constant 0 : i32
    return %c0_i32, %c0_i32_0 : i32, i32
  }
  func.func @transform_3(%arg0: i32) -> (i32, i32) {
    %c0_i32 = arith.constant 0 : i32
    %c0_i32_0 = arith.constant 0 : i32
    %c0_i32_1 = arith.constant 0 : i32
    return %c0_i32, %c0_i32_0 : i32, i32
  }
  func.func @transform_4(%arg0: i32) -> (i32, i32) {
    %c0_i32 = arith.constant 0 : i32
    %c0_i32_0 = arith.constant 0 : i32
    return %c0_i32, %arg0 : i32, i32
  }
}

</mosaic_0001>

<llo_original>
// kernel: tpu_custom_call.1
$region0: #{tpu_custom_call.1}
  #allocation0 [shape = 'u32[]', space=smem, size = 0x4, offset = 0x4, fixed_abs, tag = 'smem constant byte address 0x4 - core index']
  #allocation1 [shape = 'u32[72,128]{1,0:T(1,128)}', space=vmem, size = 0x9000, scoped, tag = 'internal scratch']
  #allocation2 [shape = 'f32[1,1]{1,0:T(1,128)S(6)}', space=smem, size = 0x200, scoped, tag = 'scoped memory for tpu_custom_call.1']
  %s0 = inlined_call_operand.vmem [shape: f32[100,10], index: 0, kind: input, shape index: {}]
  %s1 = inlined_call_operand.vmem [shape: f32[20,10], index: 1, kind: input, shape index: {}]
  %s2 = inlined_call_operand.vmem [shape: f32[20,2], index: 2, kind: input, shape index: {}]
  %s3 = inlined_call_operand.<no memory space> [shape: f32[1,1], index: 3, kind: input, shape index: {}]
  %s4 = inlined_call_operand.hbm [shape: f32[1,100], index: 4, kind: output, shape index: {}]
  %s5 = sld [smem:[#allocation0]]
  $region26: #{tpu_custom_call.1} parent=0
    _
  %s7 = ssub.s32 1, %s5
  %s8 = scalar_select 0, %s7, %s5
  %9 = sst [smem:[#allocation2]] %s3
  $region1: #{tpu_custom_call.1} parent=0
    #allocation3 [shape = 'u8[512]{0}', space=vmem, size = 0x400, scoped, tag = 'output window, operand 0, single buffered']
    #allocation4 [shape = 's32[1]{0}', space=sflag, size = 0x4, scoped, tag = 'scoped memory for tpu_custom_call.1']
    %10 = vsyncpa [#allocation4], 0
    // Predicated region
    $region2: #{tpu_custom_call.1} parent=1 // pred_check
      _
    $region3: #{tpu_custom_call.1} parent=1 // pred_check_branch
      %12 = sbr.rel (0) target = $region5
    $region4: #{tpu_custom_call.1} parent=1 // pred_region
      _
    $region5: #{tpu_custom_call.1} parent=1 // pred_fallthru
      _
    // Predicated region
    $region6: #{tpu_custom_call.1} parent=1 // pred_check
      _
    $region7: #{tpu_custom_call.1} parent=1 // pred_check_branch
      %14 = sbr.rel (0) target = $region9
    $region8: #{tpu_custom_call.1} parent=1 // pred_region
      _
    $region9: #{tpu_custom_call.1} parent=1 // pred_fallthru
      _
    // Predicated region
    $region10: #{tpu_custom_call.1} parent=1 // pred_check
      _
    $region11: #{tpu_custom_call.1} parent=1 // pred_check_branch
      %16 = sbr.rel (0) target = $region13
    $region12: #{tpu_custom_call.1} parent=1 // pred_region
      _
    $region13: #{tpu_custom_call.1} parent=1 // pred_fallthru
      _
    // Predicated region
    $region14: #{tpu_custom_call.1} parent=1 // pred_check
      _
    $region15: #{tpu_custom_call.1} parent=1 // pred_check_branch
      %18 = sbr.rel (0) target = $region17
    $region16: #{tpu_custom_call.1} parent=1 // pred_region
      _
    $region17: #{tpu_custom_call.1} parent=1 // pred_fallthru
      _
    %v19 = vld [vmem:[%s1] sm:$0xff]
    %v20 = vld [vmem:[%s1 + $0x8] sm:$0xff]
    %v21 = vld [vmem:[%s1 + $0x10] sm:$0xf]
    %v22 = vld [vmem:[%s0] sm:$0xff]
    %v23 = vld [vmem:[%s0 + $0x8] sm:$0xff]
    %v24 = vld [vmem:[%s0 + $0x10] sm:$0xff]
    %v25 = vld [vmem:[%s0 + $0x18] sm:$0xff]
    %v26 = vld [vmem:[%s0 + $0x20] sm:$0xff]
    %v27 = vld [vmem:[%s0 + $0x28] sm:$0xff]
    %v28 = vld [vmem:[%s0 + $0x30] sm:$0xff]
    %v29 = vld [vmem:[%s0 + $0x38] sm:$0xff]
    %v30 = vld [vmem:[%s0 + $0x40] sm:$0xff]
    %v31 = vld [vmem:[%s0 + $0x48] sm:$0xff]
    %v32 = vld [vmem:[%s0 + $0x50] sm:$0xff]
    %v33 = vld [vmem:[%s0 + $0x58] sm:$0xff]
    %v34 = vld [vmem:[%s0 + $0x60] sm:$0xff]
    %v35 = vld [vmem:[%s0 + $0x68] sm:$0xff]
    %v36 = vld [vmem:[%s0 + $0x70] sm:$0xff]
    %v37 = vld [vmem:[%s0 + $0x78] sm:$0xff]
    %v38 = vld [vmem:[%s2] sm:$0xff]
    %v39 = vld [vmem:[%s2 + $0x8] sm:$0xff]
    %v40 = vld [vmem:[%s2 + $0x10] sm:$0xf]
    %42 = vset.pattern.permute.xlu0 0
    %43 = vperm.xlu0 %42, %v38
    %v44 = vpop.permute.xlu0 %43
    %47 = vset.pattern.permute.xlu0 0
    %48 = vperm.xlu0 %47, %v39
    %v49 = vpop.permute.xlu0 %48
    %52 = vset.pattern.permute.xlu0 0
    %53 = vperm.xlu0 %52, %v40
    %v54 = vpop.permute.xlu0 %53
    %vm56 = vcmask 80896
    %v58 = vsel %vm56, %v19, 0
    %v61 = vsel %vm56, %v20, 0
    %v64 = vsel %vm56, %v21, 0
    %v67 = vsel %vm56, %v22, 0
    %v70 = vsel %vm56, %v23, 0
    %v73 = vsel %vm56, %v24, 0
    %v76 = vsel %vm56, %v25, 0
    %v79 = vsel %vm56, %v26, 0
    %v82 = vsel %vm56, %v27, 0
    %v85 = vsel %vm56, %v28, 0
    %v88 = vsel %vm56, %v29, 0
    %v91 = vsel %vm56, %v30, 0
    %v94 = vsel %vm56, %v31, 0
    %v97 = vsel %vm56, %v32, 0
    %v100 = vsel %vm56, %v33, 0
    %v103 = vsel %vm56, %v34, 0
    %v106 = vsel %vm56, %v35, 0
    %v109 = vsel %vm56, %v36, 0
    %v112 = vsel %vm56, %v37, 0
    %114 = vmatpush.xpose.msra.mxu0 %v112
    %115 = vmatpush.xpose.msra.mxu0 %v109
    %116 = vmatpush.xpose.msra.mxu0 %v106
    %117 = vmatpush.xpose.msra.mxu0 %v103
    %118 = vmatpush.xpose.msra.mxu0 %v100
    %119 = vmatpush.xpose.msra.mxu0 %v97
    %120 = vmatpush.xpose.msra.mxu0 %v94
    %121 = vmatpush.xpose.msra.mxu0 %v91
    %122 = vmatpush.xpose.msra.mxu0 %v88
    %123 = vmatpush.xpose.msra.mxu0 %v85
    %124 = vmatpush.xpose.msra.mxu0 %v82
    %125 = vmatpush.xpose.msra.mxu0 %v79
    %126 = vmatpush.xpose.msra.mxu0 %v76
    %127 = vmatpush.xpose.msra.mxu0 %v73
    %128 = vmatpush.xpose.msra.mxu0 %v70
    %129 = vmatpush.xpose.msra.mxu0 %v67
    %130 = vmatmul.f32.gmra.mxu0 %v58
    %v131 = vpop.f32.mrf.mxu0
    %v132 = vadd.f32 %v44, %v131
    %133 = vmatmul.f32.gmra.mxu0 %v61
    %v134 = vpop.f32.mrf.mxu0
    %v135 = vadd.f32 %v49, %v134
    %136 = vmatmul.f32.gmra.mxu0 %v64
    %v137 = vpop.f32.mrf.mxu0
    %v138 = vadd.f32 %v54, %v137
    %139 = vdwg.mxu0
    %v140 = vmax.f32 %v132, 0.0
    %v141 = vmax.f32 %v135, 0.0
    %v142 = vmax.f32 %v138, 0.0
    %143 = vset.pattern.permute.xlu0 1
    %144 = vperm.xlu0 %143, %v38
    %v145 = vpop.permute.xlu0 %144
    %147 = vset.pattern.permute.xlu0 1
    %148 = vperm.xlu0 %147, %v39
    %v149 = vpop.permute.xlu0 %148
    %151 = vset.pattern.permute.xlu0 1
    %152 = vperm.xlu0 %151, %v40
    %v153 = vpop.permute.xlu0 %152
    %v155 = vmul.f32 %v140, %v145
    %v156 = vmul.f32 %v141, %v149
    %v157 = vmul.f32 %v142, %v153
    %v158 = vadd.f32 %v155, %v156
    %vm159 = vcmask 1043456
    %v160 = vsel %vm159, %v157, 0.0
    %v161 = vadd.f32 %v158, %v160
    %v162 = vrot.slane %v161, 4
    %v163 = vadd.f32 %v161, %v162
    %v164 = vrot.slane %v163, 2
    %v165 = vadd.f32 %v163, %v164
    %v166 = vrot.slane %v165, 1
    %v167 = vadd.f32 %v165, %v166
    %s168 = sld [smem:[#allocation2]]
    %v169 = vstv %s168
    %v170 = vadd.f32 %v167, %v169
    %171 = vst [vmem:[#allocation3] sm:$0x1] %v170
    // Predicated region
    $region18: #{tpu_custom_call.1} parent=1 // pred_check
      _
    $region19: #{tpu_custom_call.1} parent=1 // pred_check_branch
      %173 = sbr.rel (0) target = $region21
    $region20: #{tpu_custom_call.1} parent=1 // pred_region
      %175 = vsyncadd [#allocation4], 0
      %s177 = sshll.u32 [#allocation3], 4
      %s178 = int_to_ptr.vmem [resolvable:$true] %s177
      %s179 = sshll.u32 %s4, 4
      %s180 = int_to_ptr.hbm [resolvable:$true] %s179
      %182 = dma.vmem_to_hbm [thread:$0]  %s178, 16, %s180, [#allocation4]
    $region21: #{tpu_custom_call.1} parent=1 // pred_fallthru
      _
    // Predicated region
    $region22: #{tpu_custom_call.1} parent=1 // pred_check
      _
    $region23: #{tpu_custom_call.1} parent=1 // pred_check_branch
      %184 = sbr.rel (0) target = $region25
    $region24: #{tpu_custom_call.1} parent=1 // pred_region
      %186 = dma.done [#allocation4], 16
    $region25: #{tpu_custom_call.1} parent=1 // pred_fallthru
      _
    %187 = vsyncpa [#allocation4], 1

</llo_original>
